<compile_context>
chip_gen: v7x
topology: tpu7x:2x2x1
jax: 0.10.0
libtpu: 0.0.40
codegen_flags: <defaults>
</compile_context>

<pallas_src>
import jax
import jax.numpy as jnp
from jax import lax
from jax.experimental import pallas as pl
from jax.experimental.pallas import tpu as pltpu


def _make_exp_neg_dist_kernel(squared: bool, trans_dtype):
    def kernel(x_ref, c_ref, aux_ref, o_ref):
        """One (block_n x block_c) output tile.

        x_ref:   (block_n, F)       tile of inputs (native dtype)
        c_ref:   (block_c, F)       components pre-scaled by -2 (zero-padded rows)
        aux_ref: (2, block_c)       row 0: ||c||^2 (unscaled), row 1: -1/sigma_eff (f32)
        o_ref:   (block_n, block_c) output tile
        """
        x = x_ref[...]

        # MXU: x @ (-2 c)^T contracted over the feature dim -> (block_n, block_c) f32.
        dots = lax.dot_general(
            x, c_ref[...],
            dimension_numbers=(((1,), (1,)), ((), ())),
            preferred_element_type=jnp.float32,
            precision=lax.Precision.HIGHEST,
        )

        # Row squared norms for this tile, accumulated in f32 (VPU + XLU).
        xf = x.astype(jnp.float32)
        x_sq = jnp.sum(xf * xf, axis=-1, keepdims=True)        # (block_n, 1)

        c_sq = aux_ref[0:1, :]                                   # (1, block_c)
        neg_inv_sigma = aux_ref[1:2, :]                          # (1, block_c)

        # Squared Euclidean distance; clamp tiny negatives from cancellation.
        d2 = jnp.maximum(x_sq + c_sq + dots, 0.0)
        d = d2 if squared else jnp.sqrt(d2)

        # exp(-d/sigma) == exp(d * (-1/sigma)); exp goes to the EUP slot.
        arg = (d * neg_inv_sigma).astype(trans_dtype)
        o_ref[...] = jnp.exp(arg).astype(o_ref.dtype)

    return kernel


def exponentially_squashed_negative_distance(
    inputs,
    components,
    sigma=1.0,
    *,
    trainable_sigma: bool = False,
    eps: float = 1e-7,
    squared: bool = False,
    block_n: int = 512,
    max_block_c: int = 2048,
    bf16_transcendentals: bool = False,   # enable on v6e/v7x only (v5e has no bf16 EUP)
):
    """inputs: (N, F), components: (C, F) -> (N, C)."""
    N, F = inputs.shape
    C, Fc = components.shape
    assert F == Fc, "feature dims must match"

    # --- sigma handling (mirrors the PyTorch `sigma` property) -----------------
    sigma = jnp.asarray(sigma, dtype=jnp.float32)
    if trainable_sigma:
        sigma = jnp.abs(sigma) + eps
    # One value per component; supports scalar or (1, C) sigma via broadcasting.
    neg_inv_sigma = jnp.broadcast_to(-1.0 / sigma, (1, C)).astype(jnp.float32)

    # --- lane-dense padding of the component axis -------------------------------
    C_pad = 128 * pl.cdiv(C, 128)
    pad_c = C_pad - C
    if pad_c:
        components_p = jnp.pad(components, ((0, pad_c), (0, 0)))
        neg_inv_sigma_p = jnp.pad(
            neg_inv_sigma, ((0, 0), (0, pad_c)), constant_values=-1.0
        )
    else:
        components_p = components
        neg_inv_sigma_p = neg_inv_sigma

    # Hoisted per-component values: ||c||^2 (unscaled) + -1/sigma, packed into one
    # (2, C_pad) f32 aux input (single DMA stream).
    comp_f32 = components_p.astype(jnp.float32)
    c_sq = jnp.sum(comp_f32 * comp_f32, axis=-1)[None, :]        # (1, C_pad)
    aux = jnp.concatenate([c_sq, neg_inv_sigma_p], axis=0)       # (2, C_pad)

    # Fold the factor -2 into the resident components (exact, power of two).
    components_p = (-2.0 * comp_f32).astype(components.dtype)

    # --- tiling -----------------------------------------------------------------
    # Component axis: lane-dense multiples of 128, capped so large C is tiled.
    block_c = min(C_pad, max(128, (max_block_c // 128) * 128))

    # Sample axis: keep >=2 grid steps whenever possible (feeds both v7x TCs).
    if block_n >= N:
        block_n = max(8, ((N // 2) // 8) * 8)
    else:
        block_n = max(8, (block_n // 8) * 8)

    in_item = jnp.dtype(inputs.dtype).itemsize
    comp_item = jnp.dtype(components_p.dtype).itemsize
    out_dtype = inputs.dtype
    out_item = jnp.dtype(out_dtype).itemsize

    def vmem_estimate(bn, bc):
        resident = bc >= C_pad
        comp_bufs = 1 if resident else 2          # Buffered(1) when resident
        x_buf = 2 * bn * F * in_item
        comp_buf = comp_bufs * bc * F * comp_item
        aux_buf = comp_bufs * 2 * bc * 4
        out_buf = 2 * bn * bc * out_item
        tmp = 3 * bn * bc * 4                     # f32 dot result + sqrt/exp temporaries
        return x_buf + comp_buf + aux_buf + out_buf + tmp

    budget = 24 << 20                             # conservative: fits v7x's 64 MiB physical
    while block_n > 128 and vmem_estimate(block_n, block_c) > budget:
        block_n //= 2
    while block_c > 128 and vmem_estimate(block_n, block_c) > budget:
        block_c = max(128, 128 * ((block_c // 2) // 128))

    n_tiles = pl.cdiv(N, block_n)
    c_tiles = pl.cdiv(C_pad, block_c)
    resident_c = c_tiles == 1

    est = vmem_estimate(block_n, block_c)
    vmem_limit = min(60 << 20, max(32 << 20, int(1.5 * est) + (4 << 20)))

    # --- block specs --------------------------------------------------------------
    x_spec = pl.BlockSpec((block_n, F), lambda i, j: (i, 0))
    if resident_c:
        # Grid-invariant inputs: single-buffer them (halves their VMEM footprint).
        comp_spec = pl.BlockSpec((block_c, F), lambda i, j: (0, 0),
                                 pipeline_mode=pl.Buffered(1))
        aux_spec = pl.BlockSpec((2, block_c), lambda i, j: (0, 0),
                                pipeline_mode=pl.Buffered(1))
    else:
        comp_spec = pl.BlockSpec((block_c, F), lambda i, j: (j, 0))
        aux_spec = pl.BlockSpec((2, block_c), lambda i, j: (0, j))
    out_spec = pl.BlockSpec((block_n, block_c), lambda i, j: (i, j))

    trans_dtype = jnp.bfloat16 if bf16_transcendentals else jnp.float32
    # TODO(synk): no custom VJP — forward only; sqrt at d2==0 would give inf grads.

    out_padded = pl.pallas_call(
        _make_exp_neg_dist_kernel(squared, trans_dtype),
        out_shape=jax.ShapeDtypeStruct((N, C_pad), out_dtype),
        grid_spec=pltpu.PrefetchScalarGridSpec(
            num_scalar_prefetch=0,
            grid=(n_tiles, c_tiles),
            in_specs=[x_spec, comp_spec, aux_spec],
            out_specs=out_spec,
        ),
        compiler_params=pltpu.CompilerParams(
            dimension_semantics=("parallel", "parallel"),
            vmem_limit_bytes=vmem_limit,
        ),
    )(inputs, components_p, aux)

    return out_padded[:, :C] if pad_c else out_padded


if __name__ == "__main__":
    # Deterministic synthetic shapes consistent with the module's forward:
    #   inputs:     (number_of_samples, number_of_features) = (64, 32)
    #   components: (number_of_components, number_of_features) = (16, 32)
    key = jax.random.PRNGKey(0)
    k_in, k_comp = jax.random.split(key)
    inputs = jax.random.uniform(k_in, (64, 32), dtype=jnp.float32)
    components = jax.random.uniform(k_comp, (16, 32), dtype=jnp.float32)

    sigma = 6.08
    eps = 1e-7

    out = exponentially_squashed_negative_distance(
        inputs, components, sigma=sigma, trainable_sigma=True, eps=eps,
        squared=False,
    )
    out = jax.block_until_ready(out)

    # Pure-JAX reference: exp(-||x - c|| / (|sigma| + eps)).
    diff = inputs[:, None, :] - components[None, :, :]
    dist = jnp.sqrt(jnp.sum(diff * diff, axis=-1))
    sigma_eff = jnp.abs(jnp.float32(sigma)) + eps
    ref = jnp.exp(-dist / sigma_eff)

    assert out.shape == (64, 16)
    max_err = float(jnp.max(jnp.abs(out - ref)))
    assert jnp.allclose(out, ref, atol=1e-3, rtol=1e-3), max_err

    print("KERNEL_OK")
</pallas_src>

<mosaic_0001>
module attributes {stable_mosaic.version = 11 : i64} {
  func.func @kernel(%arg0: i32, %arg1: i32, %arg2: memref<32x32xf32, #tpu.memory_space<vmem>>, %arg3: memref<128x32xf32, #tpu.memory_space<vmem>>, %arg4: memref<2x128xf32, #tpu.memory_space<vmem>>, %arg5: memref<32x128xf32, #tpu.memory_space<vmem>>) attributes {dimension_semantics = [#tpu.dimension_semantics<parallel>, #tpu.dimension_semantics<parallel>], iteration_bounds = array<i64: 2, 1>, scalar_prefetch = 0 : i64, scratch_operands = 0 : i64, tpu.core_type = #tpu.core_type<tc>, window_params = [{transform_indices = @transform_0, window_bounds = array<i64: 32, 32>}, {pipeline_mode = #tpu.pipeline_mode<synchronous>, transform_indices = @transform_1, window_bounds = array<i64: 128, 32>}, {pipeline_mode = #tpu.pipeline_mode<synchronous>, transform_indices = @transform_2, window_bounds = array<i64: 2, 128>}, {transform_indices = @transform_3, window_bounds = array<i64: 32, 128>}]} {
    %c0 = arith.constant 0 : index
    %c0_0 = arith.constant 0 : index
    %0 = vector.load %arg2[%c0, %c0_0] : memref<32x32xf32, #tpu.memory_space<vmem>>, vector<32x32xf32>
    %c0_1 = arith.constant 0 : index
    %c0_2 = arith.constant 0 : index
    %1 = vector.load %arg3[%c0_1, %c0_2] : memref<128x32xf32, #tpu.memory_space<vmem>>, vector<128x32xf32>
    %cst = arith.constant dense<0.000000e+00> : vector<32x128xf32>
    %2 = tpu.matmul %0, %1, %cst {dimension_numbers = #tpu.dot_dimension_numbers<[1], [1], [0], [0], [0, 0, 1, 0], [], []>, precision = #tpu.contract_precision<fp32>} : vector<32x32xf32>, vector<128x32xf32>, vector<32x128xf32> -> vector<32x128xf32>
    %3 = arith.mulf %0, %0 : vector<32x32xf32>
    %cst_3 = arith.constant dense<0.000000e+00> : vector<32xf32>
    %4 = vector.multi_reduction <add>, %3, %cst_3 [1] : vector<32x32xf32> to vector<32xf32>
    %5 = vector.shape_cast %4 : vector<32xf32> to vector<32x1xf32>
    %c0_4 = arith.constant 0 : index
    %c0_5 = arith.constant 0 : index
    %6 = vector.load %arg4[%c0_4, %c0_5] : memref<2x128xf32, #tpu.memory_space<vmem>>, vector<1x128xf32>
    %c1 = arith.constant 1 : index
    %c0_6 = arith.constant 0 : index
    %7 = vector.load %arg4[%c1, %c0_6] : memref<2x128xf32, #tpu.memory_space<vmem>>, vector<1x128xf32>
    %8 = vector.broadcast %5 : vector<32x1xf32> to vector<32x128xf32>
    %9 = vector.broadcast %6 : vector<1x128xf32> to vector<32x128xf32>
    %10 = arith.addf %8, %9 : vector<32x128xf32>
    %11 = arith.addf %10, %2 : vector<32x128xf32>
    %cst_7 = arith.constant 0.000000e+00 : f32
    %12 = vector.broadcast %cst_7 : f32 to vector<32x128xf32>
    %13 = arith.maximumf %11, %12 : vector<32x128xf32>
    %14 = math.sqrt %13 : vector<32x128xf32>
    %15 = vector.broadcast %7 : vector<1x128xf32> to vector<32x128xf32>
    %16 = arith.mulf %14, %15 : vector<32x128xf32>
    %17 = math.exp %16 : vector<32x128xf32>
    %c0_8 = arith.constant 0 : index
    %c0_9 = arith.constant 0 : index
    %18 = vector.load %arg5[%c0_8, %c0_9] : memref<32x128xf32, #tpu.memory_space<vmem>>, vector<32x128xf32>
    tpu.vector_store %arg5[%c0_8, %c0_9], %17 {strides = array<i32>} : memref<32x128xf32, #tpu.memory_space<vmem>>, vector<32x128xf32>,
    return
  }
  func.func @transform_0(%arg0: i32, %arg1: i32) -> (i32, i32) {
    %c0_i32 = arith.constant 0 : i32
    %c0_i32_0 = arith.constant 0 : i32
    return %arg0, %c0_i32 : i32, i32
  }
  func.func @transform_1(%arg0: i32, %arg1: i32) -> (i32, i32) {
    %c0_i32 = arith.constant 0 : i32
    %c0_i32_0 = arith.constant 0 : i32
    %c0_i32_1 = arith.constant 0 : i32
    return %c0_i32, %c0_i32_0 : i32, i32
  }
  func.func @transform_2(%arg0: i32, %arg1: i32) -> (i32, i32) {
    %c0_i32 = arith.constant 0 : i32
    %c0_i32_0 = arith.constant 0 : i32
    %c0_i32_1 = arith.constant 0 : i32
    return %c0_i32, %c0_i32_0 : i32, i32
  }
  func.func @transform_3(%arg0: i32, %arg1: i32) -> (i32, i32) {
    %c0_i32 = arith.constant 0 : i32
    return %arg0, %arg1 : i32, i32
  }
}

</mosaic_0001>

<llo_original>
// kernel: tpu_custom_call.1
$region0: #{tpu_custom_call.1}
  #allocation0 [shape = 'u32[]', space=smem, size = 0x4, offset = 0x4, fixed_abs, tag = 'smem constant byte address 0x4 - core index']
  #allocation1 [shape = 'u32[144,128]{1,0:T(1,128)}', space=vmem, size = 0x12000, scoped, tag = 'internal scratch']
  %s0 = inlined_call_operand.vmem [shape: f32[64,32], index: 0, kind: input, shape index: {}]
  %s1 = inlined_call_operand.vmem [shape: f32[128,32], index: 1, kind: input, shape index: {}]
  %s2 = inlined_call_operand.vmem [shape: f32[2,128], index: 2, kind: input, shape index: {}]
  %s3 = inlined_call_operand.hbm [shape: f32[64,128], index: 3, kind: output, shape index: {}]
  %s4 = sld [smem:[#allocation0]]
  $region45: #{tpu_custom_call.1} parent=0
    _
  %s6 = ssub.s32 1, %s4
  %s7 = scalar_select 0, %s6, %s4
  $region1: #{tpu_custom_call.1} parent=0
    #allocation2 [shape = 'u8[32768]{0}', space=vmem, size = 0x8000, scoped, tag = 'output window, operand 0']
    #allocation3 [shape = 's32[2]{0}', space=sflag, size = 0x8, scoped, tag = 'scoped memory for tpu_custom_call.1']
    %8 = vsyncpa [#allocation3], 0
    %s9 = scalar_lea.sflag [#allocation3], 1
    %10 = vsyncpa %s9, 0
    loop: start=0, step=1, limit=4
    $region2: #{tpu_custom_call.1} parent=1 // loop_pre_header
      _
    $region3: #{tpu_custom_call.1} parent=1 // loop_header
      %s12 = sphi 0, %s16
      %p13 = scmp.ge.s32.totalorder %s12, 4
      %s19 = sphi 0, %s31
      %s20 = sphi 0, %s27
      %s21 = sphi 0, %s19
      %s22 = sphi 0, %s20
      %s23 = sphi 0, %s21
      %s24 = sphi 0, %s22
      %s34 = sphi 0, %s36
      %s37 = sphi 0, %s34
      %s38 = sphi 0, %s37
      %s54 = sphi 0, %s38
      %s58 = sphi 0, %s58
      %s60 = sphi 0, %s58
      %s61 = sphi 0, %s60
      %s75 = sphi 0, %s61
      %s79 = sphi 0, %s79
      %s81 = sphi 0, %s79
      %s82 = sphi 0, %s81
      %s96 = sphi 0, %s82
      %s104 = sphi 0, %s106
      %s107 = sphi 0, %s104
      %s108 = sphi 0, %s107
      %s124 = sphi 0, %s108
    $region4: #{tpu_custom_call.1} parent=1 // loop_header_branch
      %15 = sbr.rel (%p13) target = $region8
    $region5: #{tpu_custom_call.1} parent=1 // loop_body
      %s17 = ssub.s32 %s12, 1
      %s18 = ssub.s32 %s12, 2
      %s25 = sadd.s32 1, %s20
      %p26 = scmp.ge.s32.totalorder %s25, 1
      %s27 = scalar_select %p26, 0, %s25
      %s28 = sadd.s32 1, %s19
      %s29 = scalar_select %p26, %s28, %s19
      %p30 = scmp.ge.s32.totalorder %s29, 2
      %s31 = scalar_select %p30, 0, %s29
      %s32 = ssub.s32 %s19, %s31
      %p33 = scmp.eq.s32.totalorder %s32, 0
      %s35 = sadd.s32 %s34, 1
      %s36 = scalar_select %p33, %s34, %s35
      %p39 = pneg %p33
      %p40 = scmp.eq.s32.totalorder %s12, 1
      %p41 = por %p39, %p40
      %p42 = scmp.ne.s32.totalorder %s34, %s37
      %p43 = scmp.eq.s32.totalorder %s12, 0
      %p44 = por %p42, %p43
      %p45 = scmp.ne.s32.totalorder %s34, %s37
      %p46 = scmp.eq.s32.totalorder %s17, 1
      %p47 = por %p45, %p46
      %p48 = scmp.ne.s32.totalorder %s37, %s38
      %p49 = scmp.eq.s32.totalorder %s17, 0
      %p50 = por %p48, %p49
      %p51 = scmp.ne.s32.totalorder %s37, %s38
      %p52 = scmp.eq.s32.totalorder %s18, 1
      %p53 = por %p51, %p52
      %p55 = scmp.ne.s32.totalorder %s38, %s54
      %p56 = scmp.eq.s32.totalorder %s18, 0
      %p57 = por %p55, %p56
      %s59 = sadd.s32 %s58, 1
      %p62 = scmp.eq.s32.totalorder %s12, 1
      %p63 = scmp.ne.s32.totalorder %s58, %s60
      %p64 = scmp.eq.s32.totalorder %s12, 0
      %p65 = por %p63, %p64
      %p66 = scmp.ne.s32.totalorder %s58, %s60
      %p67 = scmp.eq.s32.totalorder %s17, 1
      %p68 = por %p66, %p67
      %p69 = scmp.ne.s32.totalorder %s60, %s61
      %p70 = scmp.eq.s32.totalorder %s17, 0
      %p71 = por %p69, %p70
      %p72 = scmp.ne.s32.totalorder %s60, %s61
      %p73 = scmp.eq.s32.totalorder %s18, 1
      %p74 = por %p72, %p73
      %p76 = scmp.ne.s32.totalorder %s61, %s75
      %p77 = scmp.eq.s32.totalorder %s18, 0
      %p78 = por %p76, %p77
      %s80 = sadd.s32 %s79, 1
      %p83 = scmp.eq.s32.totalorder %s12, 1
      %p84 = scmp.ne.s32.totalorder %s79, %s81
      %p85 = scmp.eq.s32.totalorder %s12, 0
      %p86 = por %p84, %p85
      %p87 = scmp.ne.s32.totalorder %s79, %s81
      %p88 = scmp.eq.s32.totalorder %s17, 1
      %p89 = por %p87, %p88
      %p90 = scmp.ne.s32.totalorder %s81, %s82
      %p91 = scmp.eq.s32.totalorder %s17, 0
      %p92 = por %p90, %p91
      %p93 = scmp.ne.s32.totalorder %s81, %s82
      %p94 = scmp.eq.s32.totalorder %s18, 1
      %p95 = por %p93, %p94
      %p97 = scmp.ne.s32.totalorder %s82, %s96
      %p98 = scmp.eq.s32.totalorder %s18, 0
      %p99 = por %p97, %p98
      %s100 = ssub.s32 %s19, %s31
      %s101 = ssub.s32 %s20, %s27
      %s102 = sor.u32 %s100, %s101
      %p103 = scmp.eq.s32.totalorder %s102, 0
      %s105 = sadd.s32 %s104, 1
      %s106 = scalar_select %p103, %s104, %s105
      %p109 = pneg %p103
      %p110 = scmp.eq.s32.totalorder %s12, 1
      %p111 = por %p109, %p110
      %p112 = scmp.ne.s32.totalorder %s104, %s107
      %p113 = scmp.eq.s32.totalorder %s12, 0
      %p114 = por %p112, %p113
      %p115 = scmp.ne.s32.totalorder %s104, %s107
      %p116 = scmp.eq.s32.totalorder %s17, 1
      %p117 = por %p115, %p116
      %p118 = scmp.ne.s32.totalorder %s107, %s108
      %p119 = scmp.eq.s32.totalorder %s17, 0
      %p120 = por %p118, %p119
      %p121 = scmp.ne.s32.totalorder %s107, %s108
      %p122 = scmp.eq.s32.totalorder %s18, 1
      %p123 = por %p121, %p122
      %p125 = scmp.ne.s32.totalorder %s108, %s124
      %p126 = scmp.eq.s32.totalorder %s18, 0
      %p127 = por %p125, %p126
      %p128 = scmp.le.s32.totalorder 1, %s12
      %p129 = scmp.lt.s32.totalorder %s12, 3
      %p130 = pnand %p128, %p129
      %p131 = pneg %p130
      // Predicated region
      $region9: #{tpu_custom_call.1} parent=5 // pred_check
        _
      $region10: #{tpu_custom_call.1} parent=5 // pred_check_branch
        %133 = sbr.rel (%p130) target = $region12
      $region11: #{tpu_custom_call.1} parent=5 // pred_region
        %s134 = ssub.s32 %s12, 1
        // Predicated region
        $region13: #{tpu_custom_call.1} parent=11 // pred_check
          %p135 = pneg %p71
        $region14: #{tpu_custom_call.1} parent=11 // pred_check_branch
          %137 = sbr.rel (%p135) target = $region16
        $region15: #{tpu_custom_call.1} parent=11 // pred_region
          _
        $region16: #{tpu_custom_call.1} parent=11 // pred_fallthru
          _
        // Predicated region
        $region17: #{tpu_custom_call.1} parent=11 // pred_check
          %p138 = pneg %p92
        $region18: #{tpu_custom_call.1} parent=11 // pred_check_branch
          %140 = sbr.rel (%p138) target = $region20
        $region19: #{tpu_custom_call.1} parent=11 // pred_region
          _
        $region20: #{tpu_custom_call.1} parent=11 // pred_fallthru
          _
      $region12: #{tpu_custom_call.1} parent=5 // pred_fallthru
        _
      %p141 = scmp.lt.s32.totalorder %s12, 2
      // Predicated region
      $region21: #{tpu_custom_call.1} parent=5 // pred_check
        %p142 = pneg %p141
      $region22: #{tpu_custom_call.1} parent=5 // pred_check_branch
        %144 = sbr.rel (%p142) target = $region24
      $region23: #{tpu_custom_call.1} parent=5 // pred_region
        // Predicated region
        $region25: #{tpu_custom_call.1} parent=23 // pred_check
          %p145 = pneg %p44
        $region26: #{tpu_custom_call.1} parent=23 // pred_check_branch
          %147 = sbr.rel (%p145) target = $region28
        $region27: #{tpu_custom_call.1} parent=23 // pred_region
          %s148 = smul.u32 4, %s19
          %p149 = scmp.lt.s32.totalorder %s148, 7
          %s150 = scalar_select %p149, %s148, 7
          %s151 = smul.addr %s150, 8
          %s152 = scalar_lea.vmem %s0, %s151
          %s153 = smul.u32 4, %s19
        $region28: #{tpu_custom_call.1} parent=23 // pred_fallthru
          _
      $region24: #{tpu_custom_call.1} parent=5 // pred_fallthru
        _
      %p154 = scmp.le.s32.totalorder 1, %s12
      %p155 = scmp.lt.s32.totalorder %s12, 3
      %p156 = pnand %p154, %p155
      %p157 = pneg %p156
      // Predicated region
      $region29: #{tpu_custom_call.1} parent=5 // pred_check
        _
      $region30: #{tpu_custom_call.1} parent=5 // pred_check_branch
        %159 = sbr.rel (%p156) target = $region32
      $region31: #{tpu_custom_call.1} parent=5 // pred_region
        %s160 = ssub.s32 %s12, 1
        %s161 = smul.u32 4, %s21
        %p162 = scmp.lt.s32.totalorder %s161, 7
        %s163 = scalar_select %p162, %s161, 7
        %s164 = smul.addr %s163, 8
        %s165 = scalar_lea.vmem %s0, %s164
        %p166 = pneg %p50
        %p167 = pneg %p47
        %p168 = pneg %p71
        %p169 = pneg %p68
        %p170 = pneg %p92
        %p171 = pneg %p89
        %p172 = pneg %p120
        %p173 = pneg %p117
        %s174 = sand.u32 %s107, 1
        %s175 = scalar_lea.sflag [#allocation3], %s174
        %s176 = sand.u32 %s107, 1
        %s177 = smul.addr %s176, 32
        %s178 = scalar_lea.vmem [#allocation2], %s177
        %s179 = smul.u32 4, %s21
        %p180 = scmp.lt.s32.totalorder %s179, 7
        %s181 = scalar_select %p180, %s179, 7
        %s182 = smul.addr %s181, 8
        %s183 = scalar_lea.vmem %s0, %s182
        %s184 = smul.u32 4, %s21
        %s185 = smul.u32 4, %s21
        %v186 = vld [vmem:[%s183] sm:$0xff]
        %v187 = vld [vmem:[%s183 + $0x8] sm:$0xff]
        %v188 = vld [vmem:[%s183 + $0x10] sm:$0xff]
        %v189 = vld [vmem:[%s183 + $0x18] sm:$0xff]
        %v190 = vld [vmem:[%s1] sm:$0xff]
        %v191 = vld [vmem:[%s1 + $0x8] sm:$0xff]
        %v192 = vld [vmem:[%s1 + $0x10] sm:$0xff]
        %v193 = vld [vmem:[%s1 + $0x18] sm:$0xff]
        %v194 = vld [vmem:[%s1 + $0x20] sm:$0xff]
        %v195 = vld [vmem:[%s1 + $0x28] sm:$0xff]
        %v196 = vld [vmem:[%s1 + $0x30] sm:$0xff]
        %v197 = vld [vmem:[%s1 + $0x38] sm:$0xff]
        %v198 = vld [vmem:[%s1 + $0x40] sm:$0xff]
        %v199 = vld [vmem:[%s1 + $0x48] sm:$0xff]
        %v200 = vld [vmem:[%s1 + $0x50] sm:$0xff]
        %v201 = vld [vmem:[%s1 + $0x58] sm:$0xff]
        %v202 = vld [vmem:[%s1 + $0x60] sm:$0xff]
        %v203 = vld [vmem:[%s1 + $0x68] sm:$0xff]
        %v204 = vld [vmem:[%s1 + $0x70] sm:$0xff]
        %v205 = vld [vmem:[%s1 + $0x78] sm:$0xff]
        %vm206 = vcmask 261120
        %v208 = vsel %vm206, %v186, 0
        %v211 = vsel %vm206, %v187, 0
        %v214 = vsel %vm206, %v188, 0
        %v217 = vsel %vm206, %v189, 0
        %v220 = vsel %vm206, %v190, 0
        %v223 = vsel %vm206, %v191, 0
        %v226 = vsel %vm206, %v192, 0
        %v229 = vsel %vm206, %v193, 0
        %v232 = vsel %vm206, %v194, 0
        %v235 = vsel %vm206, %v195, 0
        %v238 = vsel %vm206, %v196, 0
        %v241 = vsel %vm206, %v197, 0
        %v244 = vsel %vm206, %v198, 0
        %v247 = vsel %vm206, %v199, 0
        %v250 = vsel %vm206, %v200, 0
        %v253 = vsel %vm206, %v201, 0
        %v256 = vsel %vm206, %v202, 0
        %v259 = vsel %vm206, %v203, 0
        %v262 = vsel %vm206, %v204, 0
        %v265 = vsel %vm206, %v205, 0
        %267 = vmatprep.subr.mxu0 0.0
        %v268 = vand.u32 %v220, 4294901760
        %269 = vmatpush1.xpose.msra.mxu0 %v268
        %270 = vmatprep.subr.mxu0 0.0
        %v271 = vand.u32 %v223, 4294901760
        %272 = vmatpush1.xpose.msra.mxu0 %v271
        %273 = vmatprep.subr.mxu0 0.0
        %v274 = vand.u32 %v226, 4294901760
        %275 = vmatpush1.xpose.msra.mxu0 %v274
        %276 = vmatprep.subr.mxu0 0.0
        %v277 = vand.u32 %v229, 4294901760
        %278 = vmatpush1.xpose.msra.mxu0 %v277
        %279 = vmatprep.subr.mxu0 0.0
        %v280 = vand.u32 %v232, 4294901760
        %281 = vmatpush1.xpose.msra.mxu0 %v280
        %282 = vmatprep.subr.mxu0 0.0
        %v283 = vand.u32 %v235, 4294901760
        %284 = vmatpush1.xpose.msra.mxu0 %v283
        %285 = vmatprep.subr.mxu0 0.0
        %v286 = vand.u32 %v238, 4294901760
        %287 = vmatpush1.xpose.msra.mxu0 %v286
        %288 = vmatprep.subr.mxu0 0.0
        %v289 = vand.u32 %v241, 4294901760
        %290 = vmatpush1.xpose.msra.mxu0 %v289
        %291 = vmatprep.subr.mxu0 0.0
        %v292 = vand.u32 %v244, 4294901760
        %293 = vmatpush1.xpose.msra.mxu0 %v292
        %294 = vmatprep.subr.mxu0 0.0
        %v295 = vand.u32 %v247, 4294901760
        %296 = vmatpush1.xpose.msra.mxu0 %v295
        %297 = vmatprep.subr.mxu0 0.0
        %v298 = vand.u32 %v250, 4294901760
        %299 = vmatpush1.xpose.msra.mxu0 %v298
        %300 = vmatprep.subr.mxu0 0.0
        %v301 = vand.u32 %v253, 4294901760
        %302 = vmatpush1.xpose.msra.mxu0 %v301
        %303 = vmatprep.subr.mxu0 0.0
        %v304 = vand.u32 %v256, 4294901760
        %305 = vmatpush1.xpose.msra.mxu0 %v304
        %306 = vmatprep.subr.mxu0 0.0
        %v307 = vand.u32 %v259, 4294901760
        %308 = vmatpush1.xpose.msra.mxu0 %v307
        %309 = vmatprep.subr.mxu0 0.0
        %v310 = vand.u32 %v262, 4294901760
        %311 = vmatpush1.xpose.msra.mxu0 %v310
        %312 = vmatprep.subr.mxu0 0.0
        %v313 = vand.u32 %v265, 4294901760
        %314 = vmatpush1.xpose.msra.mxu0 %v313
        %315 = vmatprep.subr.mxu0 0.0
        %316 = vmatpush1.xpose.msra.mxu0 0.0
        %317 = vmatprep.subr.mxu0 0.0
        %318 = vmatpush1.xpose.msra.mxu0 0.0
        %319 = vmatprep.subr.mxu0 0.0
        %320 = vmatpush1.xpose.msra.mxu0 0.0
        %321 = vmatprep.subr.mxu0 0.0
        %322 = vmatpush1.xpose.msra.mxu0 0.0
        %323 = vmatprep.subr.mxu0 0.0
        %324 = vmatpush1.xpose.msra.mxu0 0.0
        %325 = vmatprep.subr.mxu0 0.0
        %326 = vmatpush1.xpose.msra.mxu0 0.0
        %327 = vmatprep.subr.mxu0 0.0
        %328 = vmatpush1.xpose.msra.mxu0 0.0
        %329 = vmatprep.subr.mxu0 0.0
        %330 = vmatpush1.xpose.msra.mxu0 0.0
        %331 = vmatprep.subr.mxu0 0.0
        %332 = vmatpush1.xpose.msra.mxu0 0.0
        %333 = vmatprep.subr.mxu0 0.0
        %334 = vmatpush1.xpose.msra.mxu0 0.0
        %335 = vmatprep.subr.mxu0 0.0
        %336 = vmatpush1.xpose.msra.mxu0 0.0
        %337 = vmatprep.subr.mxu0 0.0
        %338 = vmatpush1.xpose.msra.mxu0 0.0
        %339 = vmatprep.subr.mxu0 0.0
        %340 = vmatpush1.xpose.msra.mxu0 0.0
        %341 = vmatprep.subr.mxu0 0.0
        %342 = vmatpush1.xpose.msra.mxu0 0.0
        %343 = vmatprep.subr.mxu0 0.0
        %344 = vmatpush1.xpose.msra.mxu0 0.0
        %345 = vmatprep.subr.mxu0 0.0
        %346 = vmatpush1.xpose.msra.mxu0 0.0
        %347 = vmatprep.mubr.f32.mxu0 0.0
        %v348 = vand.u32 %v208, 4294901760
        %v349 = vsub.f32 %v208, %v348
        %v350 = vand.u32 %v349, 4294901760
        %v351 = vsub.f32 %v349, %v350
        %v352 = vand.u32 %v351, 4294901760
        %353 = vmatmul.mubr.f32.gmra.mrb[0].mxu0 %v352
        %v354 = vpop.f32.mrb[0].mxu0
        %v355 = vadd.f32 0.0, %v354
        %v356 = vpop.f32.mrb[0].mxu0
        %357 = vmatprep.mubr.f32.mxu0 0.0
        %v358 = vand.u32 %v211, 4294901760
        %v359 = vsub.f32 %v211, %v358
        %v360 = vand.u32 %v359, 4294901760
        %v361 = vsub.f32 %v359, %v360
        %v362 = vand.u32 %v361, 4294901760
        %363 = vmatmul.mubr.f32.gmra.mrb[0].mxu0 %v362
        %v364 = vpop.f32.mrb[0].mxu0
        %v365 = vadd.f32 0.0, %v364
        %v366 = vpop.f32.mrb[0].mxu0
        %367 = vmatprep.mubr.f32.mxu0 0.0
        %v368 = vand.u32 %v214, 4294901760
        %v369 = vsub.f32 %v214, %v368
        %v370 = vand.u32 %v369, 4294901760
        %v371 = vsub.f32 %v369, %v370
        %v372 = vand.u32 %v371, 4294901760
        %373 = vmatmul.mubr.f32.gmra.mrb[0].mxu0 %v372
        %v374 = vpop.f32.mrb[0].mxu0
        %v375 = vadd.f32 0.0, %v374
        %v376 = vpop.f32.mrb[0].mxu0
        %377 = vmatprep.mubr.f32.mxu0 0.0
        %v378 = vand.u32 %v217, 4294901760
        %v379 = vsub.f32 %v217, %v378
        %v380 = vand.u32 %v379, 4294901760
        %v381 = vsub.f32 %v379, %v380
        %v382 = vand.u32 %v381, 4294901760
        %383 = vmatmul.mubr.f32.gmra.mrb[0].mxu0 %v382
        %v384 = vpop.f32.mrb[0].mxu0
        %v385 = vadd.f32 0.0, %v384
        %v386 = vpop.f32.mrb[0].mxu0
        %387 = vdwg.mxu0
        %388 = vmatprep.subr.mxu0 0.0
        %v389 = vand.u32 %v220, 4294901760
        %v390 = vsub.f32 %v220, %v389
        %v391 = vand.u32 %v390, 4294901760
        %v392 = vsub.f32 %v390, %v391
        %v393 = vand.u32 %v392, 4294901760
        %394 = vmatpush1.xpose.msra.mxu0 %v393
        %395 = vmatprep.subr.mxu0 0.0
        %v396 = vand.u32 %v223, 4294901760
        %v397 = vsub.f32 %v223, %v396
        %v398 = vand.u32 %v397, 4294901760
        %v399 = vsub.f32 %v397, %v398
        %v400 = vand.u32 %v399, 4294901760
        %401 = vmatpush1.xpose.msra.mxu0 %v400
        %402 = vmatprep.subr.mxu0 0.0
        %v403 = vand.u32 %v226, 4294901760
        %v404 = vsub.f32 %v226, %v403
        %v405 = vand.u32 %v404, 4294901760
        %v406 = vsub.f32 %v404, %v405
        %v407 = vand.u32 %v406, 4294901760
        %408 = vmatpush1.xpose.msra.mxu0 %v407
        %409 = vmatprep.subr.mxu0 0.0
        %v410 = vand.u32 %v229, 4294901760
        %v411 = vsub.f32 %v229, %v410
        %v412 = vand.u32 %v411, 4294901760
        %v413 = vsub.f32 %v411, %v412
        %v414 = vand.u32 %v413, 4294901760
        %415 = vmatpush1.xpose.msra.mxu0 %v414
        %416 = vmatprep.subr.mxu0 0.0
        %v417 = vand.u32 %v232, 4294901760
        %v418 = vsub.f32 %v232, %v417
        %v419 = vand.u32 %v418, 4294901760
        %v420 = vsub.f32 %v418, %v419
        %v421 = vand.u32 %v420, 4294901760
        %422 = vmatpush1.xpose.msra.mxu0 %v421
        %423 = vmatprep.subr.mxu0 0.0
        %v424 = vand.u32 %v235, 4294901760
        %v425 = vsub.f32 %v235, %v424
        %v426 = vand.u32 %v425, 4294901760
        %v427 = vsub.f32 %v425, %v426
        %v428 = vand.u32 %v427, 4294901760
        %429 = vmatpush1.xpose.msra.mxu0 %v428
        %430 = vmatprep.subr.mxu0 0.0
        %v431 = vand.u32 %v238, 4294901760
        %v432 = vsub.f32 %v238, %v431
        %v433 = vand.u32 %v432, 4294901760
        %v434 = vsub.f32 %v432, %v433
        %v435 = vand.u32 %v434, 4294901760
        %436 = vmatpush1.xpose.msra.mxu0 %v435
        %437 = vmatprep.subr.mxu0 0.0
        %v438 = vand.u32 %v241, 4294901760
        %v439 = vsub.f32 %v241, %v438
        %v440 = vand.u32 %v439, 4294901760
        %v441 = vsub.f32 %v439, %v440
        %v442 = vand.u32 %v441, 4294901760
        %443 = vmatpush1.xpose.msra.mxu0 %v442
        %444 = vmatprep.subr.mxu0 0.0
        %v445 = vand.u32 %v244, 4294901760
        %v446 = vsub.f32 %v244, %v445
        %v447 = vand.u32 %v446, 4294901760
        %v448 = vsub.f32 %v446, %v447
        %v449 = vand.u32 %v448, 4294901760
        %450 = vmatpush1.xpose.msra.mxu0 %v449
        %451 = vmatprep.subr.mxu0 0.0
        %v452 = vand.u32 %v247, 4294901760
        %v453 = vsub.f32 %v247, %v452
        %v454 = vand.u32 %v453, 4294901760
        %v455 = vsub.f32 %v453, %v454
        %v456 = vand.u32 %v455, 4294901760
        %457 = vmatpush1.xpose.msra.mxu0 %v456
        %458 = vmatprep.subr.mxu0 0.0
        %v459 = vand.u32 %v250, 4294901760
        %v460 = vsub.f32 %v250, %v459
        %v461 = vand.u32 %v460, 4294901760
        %v462 = vsub.f32 %v460, %v461
        %v463 = vand.u32 %v462, 4294901760
        %464 = vmatpush1.xpose.msra.mxu0 %v463
        %465 = vmatprep.subr.mxu0 0.0
        %v466 = vand.u32 %v253, 4294901760
        %v467 = vsub.f32 %v253, %v466
        %v468 = vand.u32 %v467, 4294901760
        %v469 = vsub.f32 %v467, %v468
        %v470 = vand.u32 %v469, 4294901760
        %471 = vmatpush1.xpose.msra.mxu0 %v470
        %472 = vmatprep.subr.mxu0 0.0
        %v473 = vand.u32 %v256, 4294901760
        %v474 = vsub.f32 %v256, %v473
        %v475 = vand.u32 %v474, 4294901760
        %v476 = vsub.f32 %v474, %v475
        %v477 = vand.u32 %v476, 4294901760
        %478 = vmatpush1.xpose.msra.mxu0 %v477
        %479 = vmatprep.subr.mxu0 0.0
        %v480 = vand.u32 %v259, 4294901760
        %v481 = vsub.f32 %v259, %v480
        %v482 = vand.u32 %v481, 4294901760
        %v483 = vsub.f32 %v481, %v482
        %v484 = vand.u32 %v483, 4294901760
        %485 = vmatpush1.xpose.msra.mxu0 %v484
        %486 = vmatprep.subr.mxu0 0.0
        %v487 = vand.u32 %v262, 4294901760
        %v488 = vsub.f32 %v262, %v487
        %v489 = vand.u32 %v488, 4294901760
        %v490 = vsub.f32 %v488, %v489
        %v491 = vand.u32 %v490, 4294901760
        %492 = vmatpush1.xpose.msra.mxu0 %v491
        %493 = vmatprep.subr.mxu0 0.0
        %v494 = vand.u32 %v265, 4294901760
        %v495 = vsub.f32 %v265, %v494
        %v496 = vand.u32 %v495, 4294901760
        %v497 = vsub.f32 %v495, %v496
        %v498 = vand.u32 %v497, 4294901760
        %499 = vmatpush1.xpose.msra.mxu0 %v498
        %500 = vmatprep.subr.mxu0 0.0
        %501 = vmatpush1.xpose.msra.mxu0 0.0
        %502 = vmatprep.subr.mxu0 0.0
        %503 = vmatpush1.xpose.msra.mxu0 0.0
        %504 = vmatprep.subr.mxu0 0.0
        %505 = vmatpush1.xpose.msra.mxu0 0.0
        %506 = vmatprep.subr.mxu0 0.0
        %507 = vmatpush1.xpose.msra.mxu0 0.0
        %508 = vmatprep.subr.mxu0 0.0
        %509 = vmatpush1.xpose.msra.mxu0 0.0
        %510 = vmatprep.subr.mxu0 0.0
        %511 = vmatpush1.xpose.msra.mxu0 0.0
        %512 = vmatprep.subr.mxu0 0.0
        %513 = vmatpush1.xpose.msra.mxu0 0.0
        %514 = vmatprep.subr.mxu0 0.0
        %515 = vmatpush1.xpose.msra.mxu0 0.0
        %516 = vmatprep.subr.mxu0 0.0
        %517 = vmatpush1.xpose.msra.mxu0 0.0
        %518 = vmatprep.subr.mxu0 0.0
        %519 = vmatpush1.xpose.msra.mxu0 0.0
        %520 = vmatprep.subr.mxu0 0.0
        %521 = vmatpush1.xpose.msra.mxu0 0.0
        %522 = vmatprep.subr.mxu0 0.0
        %523 = vmatpush1.xpose.msra.mxu0 0.0
        %524 = vmatprep.subr.mxu0 0.0
        %525 = vmatpush1.xpose.msra.mxu0 0.0
        %526 = vmatprep.subr.mxu0 0.0
        %527 = vmatpush1.xpose.msra.mxu0 0.0
        %528 = vmatprep.subr.mxu0 0.0
        %529 = vmatpush1.xpose.msra.mxu0 0.0
        %530 = vmatprep.subr.mxu0 0.0
        %531 = vmatpush1.xpose.msra.mxu0 0.0
        %532 = vmatprep.mubr.f32.mxu0 0.0
        %v533 = vand.u32 %v208, 4294901760
        %534 = vmatmul.mubr.f32.gmra.mrb[0].mxu0 %v533
        %v535 = vpop.f32.mrb[0].mxu0
        %v536 = vadd.f32 %v355, %v535
        %v537 = vpop.f32.mrb[0].mxu0
        %538 = vmatprep.mubr.f32.mxu0 0.0
        %v539 = vand.u32 %v211, 4294901760
        %540 = vmatmul.mubr.f32.gmra.mrb[0].mxu0 %v539
        %v541 = vpop.f32.mrb[0].mxu0
        %v542 = vadd.f32 %v365, %v541
        %v543 = vpop.f32.mrb[0].mxu0
        %544 = vmatprep.mubr.f32.mxu0 0.0
        %v545 = vand.u32 %v214, 4294901760
        %546 = vmatmul.mubr.f32.gmra.mrb[0].mxu0 %v545
        %v547 = vpop.f32.mrb[0].mxu0
        %v548 = vadd.f32 %v375, %v547
        %v549 = vpop.f32.mrb[0].mxu0
        %550 = vmatprep.mubr.f32.mxu0 0.0
        %v551 = vand.u32 %v217, 4294901760
        %552 = vmatmul.mubr.f32.gmra.mrb[0].mxu0 %v551
        %v553 = vpop.f32.mrb[0].mxu0
        %v554 = vadd.f32 %v385, %v553
        %v555 = vpop.f32.mrb[0].mxu0
        %556 = vdwg.mxu0
        %557 = vmatprep.subr.mxu0 0.0
        %v558 = vand.u32 %v220, 4294901760
        %v559 = vsub.f32 %v220, %v558
        %560 = vmatpush1.xpose.msra.mxu0 %v559
        %561 = vmatprep.subr.mxu0 0.0
        %v562 = vand.u32 %v223, 4294901760
        %v563 = vsub.f32 %v223, %v562
        %564 = vmatpush1.xpose.msra.mxu0 %v563
        %565 = vmatprep.subr.mxu0 0.0
        %v566 = vand.u32 %v226, 4294901760
        %v567 = vsub.f32 %v226, %v566
        %568 = vmatpush1.xpose.msra.mxu0 %v567
        %569 = vmatprep.subr.mxu0 0.0
        %v570 = vand.u32 %v229, 4294901760
        %v571 = vsub.f32 %v229, %v570
        %572 = vmatpush1.xpose.msra.mxu0 %v571
        %573 = vmatprep.subr.mxu0 0.0
        %v574 = vand.u32 %v232, 4294901760
        %v575 = vsub.f32 %v232, %v574
        %576 = vmatpush1.xpose.msra.mxu0 %v575
        %577 = vmatprep.subr.mxu0 0.0
        %v578 = vand.u32 %v235, 4294901760
        %v579 = vsub.f32 %v235, %v578
        %580 = vmatpush1.xpose.msra.mxu0 %v579
        %581 = vmatprep.subr.mxu0 0.0
        %v582 = vand.u32 %v238, 4294901760
        %v583 = vsub.f32 %v238, %v582
        %584 = vmatpush1.xpose.msra.mxu0 %v583
        %585 = vmatprep.subr.mxu0 0.0
        %v586 = vand.u32 %v241, 4294901760
        %v587 = vsub.f32 %v241, %v586
        %588 = vmatpush1.xpose.msra.mxu0 %v587
        %589 = vmatprep.subr.mxu0 0.0
        %v590 = vand.u32 %v244, 4294901760
        %v591 = vsub.f32 %v244, %v590
        %592 = vmatpush1.xpose.msra.mxu0 %v591
        %593 = vmatprep.subr.mxu0 0.0
        %v594 = vand.u32 %v247, 4294901760
        %v595 = vsub.f32 %v247, %v594
        %596 = vmatpush1.xpose.msra.mxu0 %v595
        %597 = vmatprep.subr.mxu0 0.0
        %v598 = vand.u32 %v250, 4294901760
        %v599 = vsub.f32 %v250, %v598
        %600 = vmatpush1.xpose.msra.mxu0 %v599
        %601 = vmatprep.subr.mxu0 0.0
        %v602 = vand.u32 %v253, 4294901760
        %v603 = vsub.f32 %v253, %v602
        %604 = vmatpush1.xpose.msra.mxu0 %v603
        %605 = vmatprep.subr.mxu0 0.0
        %v606 = vand.u32 %v256, 4294901760
        %v607 = vsub.f32 %v256, %v606
        %608 = vmatpush1.xpose.msra.mxu0 %v607
        %609 = vmatprep.subr.mxu0 0.0
        %v610 = vand.u32 %v259, 4294901760
        %v611 = vsub.f32 %v259, %v610
        %612 = vmatpush1.xpose.msra.mxu0 %v611
        %613 = vmatprep.subr.mxu0 0.0
        %v614 = vand.u32 %v262, 4294901760
        %v615 = vsub.f32 %v262, %v614
        %616 = vmatpush1.xpose.msra.mxu0 %v615
        %617 = vmatprep.subr.mxu0 0.0
        %v618 = vand.u32 %v265, 4294901760
        %v619 = vsub.f32 %v265, %v618
        %620 = vmatpush1.xpose.msra.mxu0 %v619
        %621 = vmatprep.subr.mxu0 0.0
        %622 = vmatpush1.xpose.msra.mxu0 0.0
        %623 = vmatprep.subr.mxu0 0.0
        %624 = vmatpush1.xpose.msra.mxu0 0.0
        %625 = vmatprep.subr.mxu0 0.0
        %626 = vmatpush1.xpose.msra.mxu0 0.0
        %627 = vmatprep.subr.mxu0 0.0
        %628 = vmatpush1.xpose.msra.mxu0 0.0
        %629 = vmatprep.subr.mxu0 0.0
        %630 = vmatpush1.xpose.msra.mxu0 0.0
        %631 = vmatprep.subr.mxu0 0.0
        %632 = vmatpush1.xpose.msra.mxu0 0.0
        %633 = vmatprep.subr.mxu0 0.0
        %634 = vmatpush1.xpose.msra.mxu0 0.0
        %635 = vmatprep.subr.mxu0 0.0
        %636 = vmatpush1.xpose.msra.mxu0 0.0
        %637 = vmatprep.subr.mxu0 0.0
        %638 = vmatpush1.xpose.msra.mxu0 0.0
        %639 = vmatprep.subr.mxu0 0.0
        %640 = vmatpush1.xpose.msra.mxu0 0.0
        %641 = vmatprep.subr.mxu0 0.0
        %642 = vmatpush1.xpose.msra.mxu0 0.0
        %643 = vmatprep.subr.mxu0 0.0
        %644 = vmatpush1.xpose.msra.mxu0 0.0
        %645 = vmatprep.subr.mxu0 0.0
        %646 = vmatpush1.xpose.msra.mxu0 0.0
        %647 = vmatprep.subr.mxu0 0.0
        %648 = vmatpush1.xpose.msra.mxu0 0.0
        %649 = vmatprep.subr.mxu0 0.0
        %650 = vmatpush1.xpose.msra.mxu0 0.0
        %651 = vmatprep.subr.mxu0 0.0
        %652 = vmatpush1.xpose.msra.mxu0 0.0
        %653 = vmatprep.mubr.f32.mxu0 0.0
        %v654 = vand.u32 %v208, 4294901760
        %v655 = vsub.f32 %v208, %v654
        %656 = vmatmul.mubr.f32.gmra.mrb[0].mxu0 %v655
        %v657 = vpop.f32.mrb[0].mxu0
        %v658 = vadd.f32 %v536, %v657
        %v659 = vpop.f32.mrb[0].mxu0
        %660 = vmatprep.mubr.f32.mxu0 0.0
        %v661 = vand.u32 %v211, 4294901760
        %v662 = vsub.f32 %v211, %v661
        %663 = vmatmul.mubr.f32.gmra.mrb[0].mxu0 %v662
        %v664 = vpop.f32.mrb[0].mxu0
        %v665 = vadd.f32 %v542, %v664
        %v666 = vpop.f32.mrb[0].mxu0
        %667 = vmatprep.mubr.f32.mxu0 0.0
        %v668 = vand.u32 %v214, 4294901760
        %v669 = vsub.f32 %v214, %v668
        %670 = vmatmul.mubr.f32.gmra.mrb[0].mxu0 %v669
        %v671 = vpop.f32.mrb[0].mxu0
        %v672 = vadd.f32 %v548, %v671
        %v673 = vpop.f32.mrb[0].mxu0
        %674 = vmatprep.mubr.f32.mxu0 0.0
        %v675 = vand.u32 %v217, 4294901760
        %v676 = vsub.f32 %v217, %v675
        %677 = vmatmul.mubr.f32.gmra.mrb[0].mxu0 %v676
        %v678 = vpop.f32.mrb[0].mxu0
        %v679 = vadd.f32 %v554, %v678
        %v680 = vpop.f32.mrb[0].mxu0
        %681 = vdwg.mxu0
        %682 = vmatprep.subr.mxu0 0.0
        %v683 = vand.u32 %v220, 4294901760
        %684 = vmatpush1.xpose.msra.mxu0 %v683
        %685 = vmatprep.subr.mxu0 0.0
        %v686 = vand.u32 %v223, 4294901760
        %687 = vmatpush1.xpose.msra.mxu0 %v686
        %688 = vmatprep.subr.mxu0 0.0
        %v689 = vand.u32 %v226, 4294901760
        %690 = vmatpush1.xpose.msra.mxu0 %v689
        %691 = vmatprep.subr.mxu0 0.0
        %v692 = vand.u32 %v229, 4294901760
        %693 = vmatpush1.xpose.msra.mxu0 %v692
        %694 = vmatprep.subr.mxu0 0.0
        %v695 = vand.u32 %v232, 4294901760
        %696 = vmatpush1.xpose.msra.mxu0 %v695
        %697 = vmatprep.subr.mxu0 0.0
        %v698 = vand.u32 %v235, 4294901760
        %699 = vmatpush1.xpose.msra.mxu0 %v698
        %700 = vmatprep.subr.mxu0 0.0
        %v701 = vand.u32 %v238, 4294901760
        %702 = vmatpush1.xpose.msra.mxu0 %v701
        %703 = vmatprep.subr.mxu0 0.0
        %v704 = vand.u32 %v241, 4294901760
        %705 = vmatpush1.xpose.msra.mxu0 %v704
        %706 = vmatprep.subr.mxu0 0.0
        %v707 = vand.u32 %v244, 4294901760
        %708 = vmatpush1.xpose.msra.mxu0 %v707
        %709 = vmatprep.subr.mxu0 0.0
        %v710 = vand.u32 %v247, 4294901760
        %711 = vmatpush1.xpose.msra.mxu0 %v710
        %712 = vmatprep.subr.mxu0 0.0
        %v713 = vand.u32 %v250, 4294901760
        %714 = vmatpush1.xpose.msra.mxu0 %v713
        %715 = vmatprep.subr.mxu0 0.0
        %v716 = vand.u32 %v253, 4294901760
        %717 = vmatpush1.xpose.msra.mxu0 %v716
        %718 = vmatprep.subr.mxu0 0.0
        %v719 = vand.u32 %v256, 4294901760
        %720 = vmatpush1.xpose.msra.mxu0 %v719
        %721 = vmatprep.subr.mxu0 0.0
        %v722 = vand.u32 %v259, 4294901760
        %723 = vmatpush1.xpose.msra.mxu0 %v722
        %724 = vmatprep.subr.mxu0 0.0
        %v725 = vand.u32 %v262, 4294901760
        %726 = vmatpush1.xpose.msra.mxu0 %v725
        %727 = vmatprep.subr.mxu0 0.0
        %v728 = vand.u32 %v265, 4294901760
        %729 = vmatpush1.xpose.msra.mxu0 %v728
        %730 = vmatprep.subr.mxu0 0.0
        %731 = vmatpush1.xpose.msra.mxu0 0.0
        %732 = vmatprep.subr.mxu0 0.0
        %733 = vmatpush1.xpose.msra.mxu0 0.0
        %734 = vmatprep.subr.mxu0 0.0
        %735 = vmatpush1.xpose.msra.mxu0 0.0
        %736 = vmatprep.subr.mxu0 0.0
        %737 = vmatpush1.xpose.msra.mxu0 0.0
        %738 = vmatprep.subr.mxu0 0.0
        %739 = vmatpush1.xpose.msra.mxu0 0.0
        %740 = vmatprep.subr.mxu0 0.0
        %741 = vmatpush1.xpose.msra.mxu0 0.0
        %742 = vmatprep.subr.mxu0 0.0
        %743 = vmatpush1.xpose.msra.mxu0 0.0
        %744 = vmatprep.subr.mxu0 0.0
        %745 = vmatpush1.xpose.msra.mxu0 0.0
        %746 = vmatprep.subr.mxu0 0.0
        %747 = vmatpush1.xpose.msra.mxu0 0.0
        %748 = vmatprep.subr.mxu0 0.0
        %749 = vmatpush1.xpose.msra.mxu0 0.0
        %750 = vmatprep.subr.mxu0 0.0
        %751 = vmatpush1.xpose.msra.mxu0 0.0
        %752 = vmatprep.subr.mxu0 0.0
        %753 = vmatpush1.xpose.msra.mxu0 0.0
        %754 = vmatprep.subr.mxu0 0.0
        %755 = vmatpush1.xpose.msra.mxu0 0.0
        %756 = vmatprep.subr.mxu0 0.0
        %757 = vmatpush1.xpose.msra.mxu0 0.0
        %758 = vmatprep.subr.mxu0 0.0
        %759 = vmatpush1.xpose.msra.mxu0 0.0
        %760 = vmatprep.subr.mxu0 0.0
        %761 = vmatpush1.xpose.msra.mxu0 0.0
        %762 = vmatprep.mubr.f32.mxu0 0.0
        %v763 = vand.u32 %v208, 4294901760
        %v764 = vsub.f32 %v208, %v763
        %v765 = vand.u32 %v764, 4294901760
        %766 = vmatmul.mubr.f32.gmra.mrb[0].mxu0 %v765
        %v767 = vpop.f32.mrb[0].mxu0
        %v768 = vadd.f32 %v658, %v767
        %v769 = vpop.f32.mrb[0].mxu0
        %770 = vmatprep.mubr.f32.mxu0 0.0
        %v771 = vand.u32 %v211, 4294901760
        %v772 = vsub.f32 %v211, %v771
        %v773 = vand.u32 %v772, 4294901760
        %774 = vmatmul.mubr.f32.gmra.mrb[0].mxu0 %v773
        %v775 = vpop.f32.mrb[0].mxu0
        %v776 = vadd.f32 %v665, %v775
        %v777 = vpop.f32.mrb[0].mxu0
        %778 = vmatprep.mubr.f32.mxu0 0.0
        %v779 = vand.u32 %v214, 4294901760
        %v780 = vsub.f32 %v214, %v779
        %v781 = vand.u32 %v780, 4294901760
        %782 = vmatmul.mubr.f32.gmra.mrb[0].mxu0 %v781
        %v783 = vpop.f32.mrb[0].mxu0
        %v784 = vadd.f32 %v672, %v783
        %v785 = vpop.f32.mrb[0].mxu0
        %786 = vmatprep.mubr.f32.mxu0 0.0
        %v787 = vand.u32 %v217, 4294901760
        %v788 = vsub.f32 %v217, %v787
        %v789 = vand.u32 %v788, 4294901760
        %790 = vmatmul.mubr.f32.gmra.mrb[0].mxu0 %v789
        %v791 = vpop.f32.mrb[0].mxu0
        %v792 = vadd.f32 %v679, %v791
        %v793 = vpop.f32.mrb[0].mxu0
        %794 = vdwg.mxu0
        %795 = vmatprep.subr.mxu0 0.0
        %v796 = vand.u32 %v220, 4294901760
        %v797 = vsub.f32 %v220, %v796
        %v798 = vand.u32 %v797, 4294901760
        %799 = vmatpush1.xpose.msra.mxu0 %v798
        %800 = vmatprep.subr.mxu0 0.0
        %v801 = vand.u32 %v223, 4294901760
        %v802 = vsub.f32 %v223, %v801
        %v803 = vand.u32 %v802, 4294901760
        %804 = vmatpush1.xpose.msra.mxu0 %v803
        %805 = vmatprep.subr.mxu0 0.0
        %v806 = vand.u32 %v226, 4294901760
        %v807 = vsub.f32 %v226, %v806
        %v808 = vand.u32 %v807, 4294901760
        %809 = vmatpush1.xpose.msra.mxu0 %v808
        %810 = vmatprep.subr.mxu0 0.0
        %v811 = vand.u32 %v229, 4294901760
        %v812 = vsub.f32 %v229, %v811
        %v813 = vand.u32 %v812, 4294901760
        %814 = vmatpush1.xpose.msra.mxu0 %v813
        %815 = vmatprep.subr.mxu0 0.0
        %v816 = vand.u32 %v232, 4294901760
        %v817 = vsub.f32 %v232, %v816
        %v818 = vand.u32 %v817, 4294901760
        %819 = vmatpush1.xpose.msra.mxu0 %v818
        %820 = vmatprep.subr.mxu0 0.0
        %v821 = vand.u32 %v235, 4294901760
        %v822 = vsub.f32 %v235, %v821
        %v823 = vand.u32 %v822, 4294901760
        %824 = vmatpush1.xpose.msra.mxu0 %v823
        %825 = vmatprep.subr.mxu0 0.0
        %v826 = vand.u32 %v238, 4294901760
        %v827 = vsub.f32 %v238, %v826
        %v828 = vand.u32 %v827, 4294901760
        %829 = vmatpush1.xpose.msra.mxu0 %v828
        %830 = vmatprep.subr.mxu0 0.0
        %v831 = vand.u32 %v241, 4294901760
        %v832 = vsub.f32 %v241, %v831
        %v833 = vand.u32 %v832, 4294901760
        %834 = vmatpush1.xpose.msra.mxu0 %v833
        %835 = vmatprep.subr.mxu0 0.0
        %v836 = vand.u32 %v244, 4294901760
        %v837 = vsub.f32 %v244, %v836
        %v838 = vand.u32 %v837, 4294901760
        %839 = vmatpush1.xpose.msra.mxu0 %v838
        %840 = vmatprep.subr.mxu0 0.0
        %v841 = vand.u32 %v247, 4294901760
        %v842 = vsub.f32 %v247, %v841
        %v843 = vand.u32 %v842, 4294901760
        %844 = vmatpush1.xpose.msra.mxu0 %v843
        %845 = vmatprep.subr.mxu0 0.0
        %v846 = vand.u32 %v250, 4294901760
        %v847 = vsub.f32 %v250, %v846
        %v848 = vand.u32 %v847, 4294901760
        %849 = vmatpush1.xpose.msra.mxu0 %v848
        %850 = vmatprep.subr.mxu0 0.0
        %v851 = vand.u32 %v253, 4294901760
        %v852 = vsub.f32 %v253, %v851
        %v853 = vand.u32 %v852, 4294901760
        %854 = vmatpush1.xpose.msra.mxu0 %v853
        %855 = vmatprep.subr.mxu0 0.0
        %v856 = vand.u32 %v256, 4294901760
        %v857 = vsub.f32 %v256, %v856
        %v858 = vand.u32 %v857, 4294901760
        %859 = vmatpush1.xpose.msra.mxu0 %v858
        %860 = vmatprep.subr.mxu0 0.0
        %v861 = vand.u32 %v259, 4294901760
        %v862 = vsub.f32 %v259, %v861
        %v863 = vand.u32 %v862, 4294901760
        %864 = vmatpush1.xpose.msra.mxu0 %v863
        %865 = vmatprep.subr.mxu0 0.0
        %v866 = vand.u32 %v262, 4294901760
        %v867 = vsub.f32 %v262, %v866
        %v868 = vand.u32 %v867, 4294901760
        %869 = vmatpush1.xpose.msra.mxu0 %v868
        %870 = vmatprep.subr.mxu0 0.0
        %v871 = vand.u32 %v265, 4294901760
        %v872 = vsub.f32 %v265, %v871
        %v873 = vand.u32 %v872, 4294901760
        %874 = vmatpush1.xpose.msra.mxu0 %v873
        %875 = vmatprep.subr.mxu0 0.0
        %876 = vmatpush1.xpose.msra.mxu0 0.0
        %877 = vmatprep.subr.mxu0 0.0
        %878 = vmatpush1.xpose.msra.mxu0 0.0
        %879 = vmatprep.subr.mxu0 0.0
        %880 = vmatpush1.xpose.msra.mxu0 0.0
        %881 = vmatprep.subr.mxu0 0.0
        %882 = vmatpush1.xpose.msra.mxu0 0.0
        %883 = vmatprep.subr.mxu0 0.0
        %884 = vmatpush1.xpose.msra.mxu0 0.0
        %885 = vmatprep.subr.mxu0 0.0
        %886 = vmatpush1.xpose.msra.mxu0 0.0
        %887 = vmatprep.subr.mxu0 0.0
        %888 = vmatpush1.xpose.msra.mxu0 0.0
        %889 = vmatprep.subr.mxu0 0.0
        %890 = vmatpush1.xpose.msra.mxu0 0.0
        %891 = vmatprep.subr.mxu0 0.0
        %892 = vmatpush1.xpose.msra.mxu0 0.0
        %893 = vmatprep.subr.mxu0 0.0
        %894 = vmatpush1.xpose.msra.mxu0 0.0
        %895 = vmatprep.subr.mxu0 0.0
        %896 = vmatpush1.xpose.msra.mxu0 0.0
        %897 = vmatprep.subr.mxu0 0.0
        %898 = vmatpush1.xpose.msra.mxu0 0.0
        %899 = vmatprep.subr.mxu0 0.0
        %900 = vmatpush1.xpose.msra.mxu0 0.0
        %901 = vmatprep.subr.mxu0 0.0
        %902 = vmatpush1.xpose.msra.mxu0 0.0
        %903 = vmatprep.subr.mxu0 0.0
        %904 = vmatpush1.xpose.msra.mxu0 0.0
        %905 = vmatprep.subr.mxu0 0.0
        %906 = vmatpush1.xpose.msra.mxu0 0.0
        %907 = vmatprep.mubr.f32.mxu0 0.0
        %v908 = vand.u32 %v208, 4294901760
        %909 = vmatmul.mubr.f32.gmra.mrb[0].mxu0 %v908
        %v910 = vpop.f32.mrb[0].mxu0
        %v911 = vadd.f32 %v768, %v910
        %v912 = vpop.f32.mrb[0].mxu0
        %913 = vmatprep.mubr.f32.mxu0 0.0
        %v914 = vand.u32 %v211, 4294901760
        %915 = vmatmul.mubr.f32.gmra.mrb[0].mxu0 %v914
        %v916 = vpop.f32.mrb[0].mxu0
        %v917 = vadd.f32 %v776, %v916
        %v918 = vpop.f32.mrb[0].mxu0
        %919 = vmatprep.mubr.f32.mxu0 0.0
        %v920 = vand.u32 %v214, 4294901760
        %921 = vmatmul.mubr.f32.gmra.mrb[0].mxu0 %v920
        %v922 = vpop.f32.mrb[0].mxu0
        %v923 = vadd.f32 %v784, %v922
        %v924 = vpop.f32.mrb[0].mxu0
        %925 = vmatprep.mubr.f32.mxu0 0.0
        %v926 = vand.u32 %v217, 4294901760
        %927 = vmatmul.mubr.f32.gmra.mrb[0].mxu0 %v926
        %v928 = vpop.f32.mrb[0].mxu0
        %v929 = vadd.f32 %v792, %v928
        %v930 = vpop.f32.mrb[0].mxu0
        %931 = vdwg.mxu0
        %932 = vmatprep.subr.mxu0 0.0
        %v933 = vand.u32 %v220, 4294901760
        %934 = vmatpush1.xpose.msra.mxu0 %v933
        %935 = vmatprep.subr.mxu0 0.0
        %v936 = vand.u32 %v223, 4294901760
        %937 = vmatpush1.xpose.msra.mxu0 %v936
        %938 = vmatprep.subr.mxu0 0.0
        %v939 = vand.u32 %v226, 4294901760
        %940 = vmatpush1.xpose.msra.mxu0 %v939
        %941 = vmatprep.subr.mxu0 0.0
        %v942 = vand.u32 %v229, 4294901760
        %943 = vmatpush1.xpose.msra.mxu0 %v942
        %944 = vmatprep.subr.mxu0 0.0
        %v945 = vand.u32 %v232, 4294901760
        %946 = vmatpush1.xpose.msra.mxu0 %v945
        %947 = vmatprep.subr.mxu0 0.0
        %v948 = vand.u32 %v235, 4294901760
        %949 = vmatpush1.xpose.msra.mxu0 %v948
        %950 = vmatprep.subr.mxu0 0.0
        %v951 = vand.u32 %v238, 4294901760
        %952 = vmatpush1.xpose.msra.mxu0 %v951
        %953 = vmatprep.subr.mxu0 0.0
        %v954 = vand.u32 %v241, 4294901760
        %955 = vmatpush1.xpose.msra.mxu0 %v954
        %956 = vmatprep.subr.mxu0 0.0
        %v957 = vand.u32 %v244, 4294901760
        %958 = vmatpush1.xpose.msra.mxu0 %v957
        %959 = vmatprep.subr.mxu0 0.0
        %v960 = vand.u32 %v247, 4294901760
        %961 = vmatpush1.xpose.msra.mxu0 %v960
        %962 = vmatprep.subr.mxu0 0.0
        %v963 = vand.u32 %v250, 4294901760
        %964 = vmatpush1.xpose.msra.mxu0 %v963
        %965 = vmatprep.subr.mxu0 0.0
        %v966 = vand.u32 %v253, 4294901760
        %967 = vmatpush1.xpose.msra.mxu0 %v966
        %968 = vmatprep.subr.mxu0 0.0
        %v969 = vand.u32 %v256, 4294901760
        %970 = vmatpush1.xpose.msra.mxu0 %v969
        %971 = vmatprep.subr.mxu0 0.0
        %v972 = vand.u32 %v259, 4294901760
        %973 = vmatpush1.xpose.msra.mxu0 %v972
        %974 = vmatprep.subr.mxu0 0.0
        %v975 = vand.u32 %v262, 4294901760
        %976 = vmatpush1.xpose.msra.mxu0 %v975
        %977 = vmatprep.subr.mxu0 0.0
        %v978 = vand.u32 %v265, 4294901760
        %979 = vmatpush1.xpose.msra.mxu0 %v978
        %980 = vmatprep.subr.mxu0 0.0
        %981 = vmatpush1.xpose.msra.mxu0 0.0
        %982 = vmatprep.subr.mxu0 0.0
        %983 = vmatpush1.xpose.msra.mxu0 0.0
        %984 = vmatprep.subr.mxu0 0.0
        %985 = vmatpush1.xpose.msra.mxu0 0.0
        %986 = vmatprep.subr.mxu0 0.0
        %987 = vmatpush1.xpose.msra.mxu0 0.0
        %988 = vmatprep.subr.mxu0 0.0
        %989 = vmatpush1.xpose.msra.mxu0 0.0
        %990 = vmatprep.subr.mxu0 0.0
        %991 = vmatpush1.xpose.msra.mxu0 0.0
        %992 = vmatprep.subr.mxu0 0.0
        %993 = vmatpush1.xpose.msra.mxu0 0.0
        %994 = vmatprep.subr.mxu0 0.0
        %995 = vmatpush1.xpose.msra.mxu0 0.0
        %996 = vmatprep.subr.mxu0 0.0
        %997 = vmatpush1.xpose.msra.mxu0 0.0
        %998 = vmatprep.subr.mxu0 0.0
        %999 = vmatpush1.xpose.msra.mxu0 0.0
        %1000 = vmatprep.subr.mxu0 0.0
        %1001 = vmatpush1.xpose.msra.mxu0 0.0
        %1002 = vmatprep.subr.mxu0 0.0
        %1003 = vmatpush1.xpose.msra.mxu0 0.0
        %1004 = vmatprep.subr.mxu0 0.0
        %1005 = vmatpush1.xpose.msra.mxu0 0.0
        %1006 = vmatprep.subr.mxu0 0.0
        %1007 = vmatpush1.xpose.msra.mxu0 0.0
        %1008 = vmatprep.subr.mxu0 0.0
        %1009 = vmatpush1.xpose.msra.mxu0 0.0
        %1010 = vmatprep.subr.mxu0 0.0
        %1011 = vmatpush1.xpose.msra.mxu0 0.0
        %1012 = vmatprep.mubr.f32.mxu0 0.0
        %v1013 = vand.u32 %v208, 4294901760
        %1014 = vmatmul.mubr.f32.gmra.mrb[0].mxu0 %v1013
        %v1015 = vpop.f32.mrb[0].mxu0
        %v1016 = vadd.f32 %v911, %v1015
        %v1017 = vpop.f32.mrb[0].mxu0
        %1018 = vmatprep.mubr.f32.mxu0 0.0
        %v1019 = vand.u32 %v211, 4294901760
        %1020 = vmatmul.mubr.f32.gmra.mrb[0].mxu0 %v1019
        %v1021 = vpop.f32.mrb[0].mxu0
        %v1022 = vadd.f32 %v917, %v1021
        %v1023 = vpop.f32.mrb[0].mxu0
        %1024 = vmatprep.mubr.f32.mxu0 0.0
        %v1025 = vand.u32 %v214, 4294901760
        %1026 = vmatmul.mubr.f32.gmra.mrb[0].mxu0 %v1025
        %v1027 = vpop.f32.mrb[0].mxu0
        %v1028 = vadd.f32 %v923, %v1027
        %v1029 = vpop.f32.mrb[0].mxu0
        %1030 = vmatprep.mubr.f32.mxu0 0.0
        %v1031 = vand.u32 %v217, 4294901760
        %1032 = vmatmul.mubr.f32.gmra.mrb[0].mxu0 %v1031
        %v1033 = vpop.f32.mrb[0].mxu0
        %v1034 = vadd.f32 %v929, %v1033
        %v1035 = vpop.f32.mrb[0].mxu0
        %1036 = vdwg.mxu0
        %v1037 = vmul.f32 %v186, %v186
        %v1038 = vmul.f32 %v187, %v187
        %v1039 = vmul.f32 %v188, %v188
        %v1040 = vmul.f32 %v189, %v189
        %v1041 = vsel %vm206, %v1037, 0.0
        %1042 = vadd.xlane.f32.xlu0 %v1041
        %v1043 = vpop.xlane.xlu0 %1042
        %v1044 = vsel %vm206, %v1038, 0.0
        %1045 = vadd.xlane.f32.xlu0 %v1044
        %v1046 = vpop.xlane.xlu0 %1045
        %v1047 = vsel %vm206, %v1039, 0.0
        %1048 = vadd.xlane.f32.xlu0 %v1047
        %v1049 = vpop.xlane.xlu0 %1048
        %v1050 = vsel %vm206, %v1040, 0.0
        %1051 = vadd.xlane.f32.xlu0 %v1050
        %v1052 = vpop.xlane.xlu0 %1051
        %v1053 = vld [vmem:[%s2] sm:$0x1]
        %v1054 = vld [vmem:[%s2 + $0x1] sm:$0x1]
        %v1055 = vlaneseq
        %v1056 = vshrl.u32 %v1055, 7
        %v1057 = vsub.s32 0, %v1056
        %v1058 = vrot.slane %v1053, %v1057
        %v1059 = vadd.f32 %v1043, %v1058
        %v1060 = vadd.f32 %v1046, %v1058
        %v1061 = vadd.f32 %v1049, %v1058
        %v1062 = vadd.f32 %v1052, %v1058
        %v1063 = vadd.f32 %v1059, %v1016
        %v1064 = vadd.f32 %v1060, %v1022
        %v1065 = vadd.f32 %v1061, %v1028
        %v1066 = vadd.f32 %v1062, %v1034
        %v1067 = vmax.f32 %v1063, 0.0
        %v1068 = vmax.f32 %v1064, 0.0
        %v1069 = vmax.f32 %v1065, 0.0
        %v1070 = vmax.f32 %v1066, 0.0
        %v1071 = vrsqrt.pop %v1067
        %v1072 = vmul.f32 %v1067, %v1071
        %vm1073 = vcmp.eq.f32.partialorder %v1067, inf
        %v1074 = vsel %vm1073, %v1067, %v1072
        %vm1075 = vcmp.eq.f32.partialorder %v1067, 0.0
        %v1076 = vand.u32 %v1067, 2147483648
        %v1077 = vsel %vm1075, %v1076, %v1074
        %v1078 = vrsqrt.pop %v1068
        %v1079 = vmul.f32 %v1068, %v1078
        %vm1080 = vcmp.eq.f32.partialorder %v1068, inf
        %v1081 = vsel %vm1080, %v1068, %v1079
        %vm1082 = vcmp.eq.f32.partialorder %v1068, 0.0
        %v1083 = vand.u32 %v1068, 2147483648
        %v1084 = vsel %vm1082, %v1083, %v1081
        %v1085 = vrsqrt.pop %v1069
        %v1086 = vmul.f32 %v1069, %v1085
        %vm1087 = vcmp.eq.f32.partialorder %v1069, inf
        %v1088 = vsel %vm1087, %v1069, %v1086
        %vm1089 = vcmp.eq.f32.partialorder %v1069, 0.0
        %v1090 = vand.u32 %v1069, 2147483648
        %v1091 = vsel %vm1089, %v1090, %v1088
        %v1092 = vrsqrt.pop %v1070
        %v1093 = vmul.f32 %v1070, %v1092
        %vm1094 = vcmp.eq.f32.partialorder %v1070, inf
        %v1095 = vsel %vm1094, %v1070, %v1093
        %vm1096 = vcmp.eq.f32.partialorder %v1070, 0.0
        %v1097 = vand.u32 %v1070, 2147483648
        %v1098 = vsel %vm1096, %v1097, %v1095
        %v1099 = vlaneseq
        %v1100 = vshrl.u32 %v1099, 7
        %v1101 = vsub.s32 0, %v1100
        %v1102 = vrot.slane %v1054, %v1101
        %v1103 = vmul.f32 %v1077, %v1102
        %v1104 = vmul.f32 %v1084, %v1102
        %v1105 = vmul.f32 %v1091, %v1102
        %v1106 = vmul.f32 %v1098, %v1102
        %v1107 = vmul.f32 %v1103, 1.442695
        %v1108 = vpow.pop %v1107
        %v1109 = vmul.f32 %v1104, 1.442695
        %v1110 = vpow.pop %v1109
        %v1111 = vmul.f32 %v1105, 1.442695
        %v1112 = vpow.pop %v1111
        %v1113 = vmul.f32 %v1106, 1.442695
        %v1114 = vpow.pop %v1113
        %1115 = vst [vmem:[%s178] sm:$0xff] %v1108
        %1116 = vst [vmem:[%s178 + $0x8] sm:$0xff] %v1110
        %1117 = vst [vmem:[%s178 + $0x10] sm:$0xff] %v1112
        %1118 = vst [vmem:[%s178 + $0x18] sm:$0xff] %v1114
        %s1119 = sand.u32 %s107, 1
        %s1120 = scalar_lea.sflag [#allocation3], %s1119
        %s1121 = sand.u32 %s107, 1
        %s1122 = smul.addr %s1121, 32
        %s1123 = scalar_lea.vmem [#allocation2], %s1122
        // Predicated region
        $region33: #{tpu_custom_call.1} parent=31 // pred_check
          %p1124 = pneg %p117
        $region34: #{tpu_custom_call.1} parent=31 // pred_check_branch
          %1126 = sbr.rel (%p1124) target = $region36
        $region35: #{tpu_custom_call.1} parent=31 // pred_region
          %s1127 = smul.u32 4, %s21
          %s1129 = ssub.s32 512, 512
          %1130 = vsyncadd %s1120, %s1129
          %s1131 = sadd.s32 %s22, %s1127
          %s1132 = smul.addr %s1131, 128
          %s1133 = scalar_lea.hbm %s3, %s1132
          %s1134 = sshll.u32 %s1123, 4
          %s1135 = int_to_ptr.vmem [resolvable:$true] %s1134
          %1140 = dma.vmem_to_hbm [thread:$0]  %s1135, 512, %s1133, %s1120, 128, 128, 8
        $region36: #{tpu_custom_call.1} parent=31 // pred_fallthru
          _
      $region32: #{tpu_custom_call.1} parent=5 // pred_fallthru
        _
      %p1141 = scmp.le.s32.totalorder 2, %s12
      // Predicated region
      $region37: #{tpu_custom_call.1} parent=5 // pred_check
        %p1142 = pneg %p1141
      $region38: #{tpu_custom_call.1} parent=5 // pred_check_branch
        %1144 = sbr.rel (%p1142) target = $region40
      $region39: #{tpu_custom_call.1} parent=5 // pred_region
        %s1145 = ssub.s32 %s12, 2
        // Predicated region
        $region41: #{tpu_custom_call.1} parent=39 // pred_check
          %p1146 = pneg %p123
        $region42: #{tpu_custom_call.1} parent=39 // pred_check_branch
          %1148 = sbr.rel (%p1146) target = $region44
        $region43: #{tpu_custom_call.1} parent=39 // pred_region
          %s1149 = sand.u32 %s108, 1
          %s1150 = scalar_lea.sflag [#allocation3], %s1149
          %s1151 = sand.u32 %s108, 1
          %s1152 = smul.addr %s1151, 32
          %s1153 = scalar_lea.vmem [#allocation2], %s1152
          %1154 = dma.done %s1150, 512
        $region44: #{tpu_custom_call.1} parent=39 // pred_fallthru
          _
      $region40: #{tpu_custom_call.1} parent=5 // pred_fallthru
        _
    $region6: #{tpu_custom_call.1} parent=1 // loop_footer
      %s16 = sadd.s32 1, %s12
    $region7: #{tpu_custom_call.1} parent=1 // loop_footer_branch
      %11 = sbr.rel target = $region3
    $region8: #{tpu_custom_call.1} parent=1 // loop_exit
      _
    %1155 = vsyncpa [#allocation3], 1
    %s1156 = scalar_lea.sflag [#allocation3], 1
    %1157 = vsyncpa %s1156, 1

</llo_original>
